<compile_context>
chip_gen: v6e
topology: v6e:2x2x1
jax: 0.10.0
libtpu: 0.0.40
codegen_flags: <defaults>
</compile_context>

<pallas_src>
import jax
import jax.numpy as jnp
from jax.experimental import pallas as pl
from jax.experimental.pallas import tpu as pltpu

VMEM_LIMIT = 48 * 1024 * 1024


def _cparams(*sem):
    return pltpu.CompilerParams(dimension_semantics=tuple(sem),
                                vmem_limit_bytes=VMEM_LIMIT)


def _row_tile(rows, cap=256):
    """Largest row tile <= cap that evenly divides `rows` (sublane friendly)."""
    for t in (256, 128, 64, 32, 16, 8):
        if t <= cap and rows % t == 0:
            return t
    return rows  # full extent (exempt from the divisibility rule)


def _col_tile(cols, cap=2048):
    """Largest vocab-column tile <= cap (multiple of 128) dividing `cols`."""
    for t in (2048, 1024, 512, 256, 128):
        if t <= cap and cols % t == 0:
            return t
    return cols


def _seq_tile(S):
    """Timesteps per grid step (amortize grid overhead, keep streaming)."""
    for t in (8, 4, 2):
        if S % t == 0 and S // t >= 2:
            return t
    return S


# ----------------------------------------------------------------------------
# Highway network fused with the encoder input projections (fwd / bwd).
#   x <- g * relu(Wn x + bn) + (1 - g) * x,   g = sigmoid(Wg x + bg)
#   out_f = x @ Wih_f,  out_b = x @ Wih_b     (biases added inside the LSTM)
# Row-tiled grid, "parallel", bf16 MXU operands / f32 accumulation.
# ----------------------------------------------------------------------------
def highway_encproj(x2d, wn_bf, bn, wg_bf, bg, wih_f_bf, wih_b_bf):
    rows, E = x2d.shape
    L = wn_bf.shape[0]
    G = wih_f_bf.shape[1]          # 4 * enc_hsz
    TR = _row_tile(rows)

    def kernel(x_ref, wn_ref, bn_ref, wg_ref, bg_ref, wf_ref, wb_ref,
               of_ref, ob_ref):
        x = x_ref[...]                                        # (TR, E) f32
        for l in range(L):                                    # static unroll
            xb = x.astype(jnp.bfloat16)
            nl = jnp.maximum(
                jnp.dot(xb, wn_ref[l], preferred_element_type=jnp.float32)
                + bn_ref[l], 0.0)
            g = jax.nn.sigmoid(
                jnp.dot(xb, wg_ref[l], preferred_element_type=jnp.float32)
                + bg_ref[l])
            x = g * nl + (1.0 - g) * x
        xb = x.astype(jnp.bfloat16)
        of_ref[...] = jnp.dot(xb, wf_ref[...], preferred_element_type=jnp.float32)
        ob_ref[...] = jnp.dot(xb, wb_ref[...], preferred_element_type=jnp.float32)

    return pl.pallas_call(
        kernel,
        out_shape=(jax.ShapeDtypeStruct((rows, G), jnp.float32),
                   jax.ShapeDtypeStruct((rows, G), jnp.float32)),
        grid=(rows // TR,),
        in_specs=[
            pl.BlockSpec((TR, E), lambda i: (i, 0)),
            pl.BlockSpec((L, E, E), lambda i: (0, 0, 0)),
            pl.BlockSpec((L, 1, E), lambda i: (0, 0, 0)),
            pl.BlockSpec((L, E, E), lambda i: (0, 0, 0)),
            pl.BlockSpec((L, 1, E), lambda i: (0, 0, 0)),
            pl.BlockSpec((E, G), lambda i: (0, 0)),
            pl.BlockSpec((E, G), lambda i: (0, 0)),
        ],
        out_specs=(pl.BlockSpec((TR, G), lambda i: (i, 0)),
                   pl.BlockSpec((TR, G), lambda i: (i, 0))),
        compiler_params=_cparams("parallel"),
    )(x2d, wn_bf, bn, wg_bf, bg, wih_f_bf, wih_b_bf)


# ----------------------------------------------------------------------------
# Generic row-tiled matmul (decoder input projection x @ Wih_x).
# ----------------------------------------------------------------------------
def matmul_rows(x2d, w_bf):
    rows, E = x2d.shape
    K = w_bf.shape[1]
    TR = _row_tile(rows)

    def kernel(x_ref, w_ref, o_ref):
        o_ref[...] = jnp.dot(x_ref[...].astype(jnp.bfloat16), w_ref[...],
                             preferred_element_type=jnp.float32)

    return pl.pallas_call(
        kernel,
        out_shape=jax.ShapeDtypeStruct((rows, K), jnp.float32),
        grid=(rows // TR,),
        in_specs=[pl.BlockSpec((TR, E), lambda i: (i, 0)),
                  pl.BlockSpec((E, K), lambda i: (0, 0))],
        out_specs=pl.BlockSpec((TR, K), lambda i: (i, 0)),
        compiler_params=_cparams("parallel"),
    )(x2d, w_bf)


# ----------------------------------------------------------------------------
# Encoder: streamed bidirectional LSTM (grid over S, TS steps per grid step,
# fwd/bwd directions fused into one MXU push per step) + gaussian head
# (mu / log_sigma / z / KL) in the last-step epilogue.
# xpf_tm / xpb_tm hold x @ Wih_f and x @ Wih_b for every timestep (time-major).
# ----------------------------------------------------------------------------
def encoder_gaussian(xpf_tm, xpb_tm, h0, c0, whh_cat_bf, b_f, b_b,
                     mwf_bf, mwb_bf, mu_b, lwf_bf, lwb_bf, ls_b, eps):
    S, B, G = xpf_tm.shape              # G = 4H
    H = G // 4
    Lat = mwf_bf.shape[1]
    TS = _seq_tile(S)
    nS = S // TS

    def kernel(xpf_ref, xpb_ref, h0_ref, c0_ref, whh_ref, bf_ref, bb_ref,
               mwf_ref, mwb_ref, mb_ref, lwf_ref, lwb_ref, lb_ref, eps_ref,
               z_ref, loss_ref, hN_ref, cN_ref, h_sc, c_sc):
        s = pl.program_id(0)

        @pl.when(s == 0)
        def _():
            h_sc[0:B, :] = h0_ref[0]
            h_sc[B:2 * B, :] = h0_ref[1]
            c_sc[0:B, :] = c0_ref[0]
            c_sc[B:2 * B, :] = c0_ref[1]

        whh = whh_ref[...]                 # (H, 8H) bf16, fwd | bwd columns
        b_fv = bf_ref[...]
        b_bv = bb_ref[...]

        def cell(gates, c):
            i = jax.nn.sigmoid(gates[:, 0:H])
            f = jax.nn.sigmoid(gates[:, H:2 * H])
            g = jnp.tanh(gates[:, 2 * H:3 * H])
            o = jax.nn.sigmoid(gates[:, 3 * H:4 * H])
            c_new = f * c + i * g
            return o * jnp.tanh(c_new), c_new

        def body(k, carry):
            h_all, c_all = carry                              # (2B, H) each
            out = jnp.dot(h_all.astype(jnp.bfloat16), whh,
                          preferred_element_type=jnp.float32)  # (2B, 8H)
            gates_f = xpf_ref[k] + b_fv + out[0:B, 0:4 * H]
            gates_b = xpb_ref[TS - 1 - k] + b_bv + out[B:2 * B, 4 * H:8 * H]
            hf, cf = cell(gates_f, c_all[0:B])
            hb, cb = cell(gates_b, c_all[B:2 * B])
            return (jnp.concatenate([hf, hb], axis=0),
                    jnp.concatenate([cf, cb], axis=0))

        h_all, c_all = jax.lax.fori_loop(
            0, TS, body, (h_sc[...], c_sc[...]), unroll=True)
        h_sc[...] = h_all
        c_sc[...] = c_all

        @pl.when(s == nS - 1)
        def _():
            hf = h_all[0:B]
            hb = h_all[B:2 * B]
            hf16 = hf.astype(jnp.bfloat16)
            hb16 = hb.astype(jnp.bfloat16)
            mu = (jnp.dot(hf16, mwf_ref[...], preferred_element_type=jnp.float32)
                  + jnp.dot(hb16, mwb_ref[...], preferred_element_type=jnp.float32)
                  + mb_ref[...])
            log_sigma = (jnp.dot(hf16, lwf_ref[...], preferred_element_type=jnp.float32)
                         + jnp.dot(hb16, lwb_ref[...], preferred_element_type=jnp.float32)
                         + lb_ref[...])
            sigma = jnp.exp(0.5 * log_sigma)
            sigma2 = jnp.exp(log_sigma)                 # sigma^2, stable form
            per_ex = jnp.sum(mu * mu + sigma2 - log_sigma - 1.0,
                             axis=-1, keepdims=True)    # (B, 1)
            loss_ref[...] = 0.5 * jnp.sum(per_ex, axis=0, keepdims=True) / float(B)
            z_ref[...] = mu + sigma * eps_ref[...]
            hN_ref[0] = hf
            hN_ref[1] = hb
            cN_ref[0] = c_all[0:B]
            cN_ref[1] = c_all[B:2 * B]

    return pl.pallas_call(
        kernel,
        out_shape=(
            jax.ShapeDtypeStruct((B, Lat), jnp.float32),
            jax.ShapeDtypeStruct((1, 1), jnp.float32),
            jax.ShapeDtypeStruct((2, B, H), jnp.float32),
            jax.ShapeDtypeStruct((2, B, H), jnp.float32),
        ),
        grid=(nS,),
        in_specs=[
            pl.BlockSpec((TS, B, G), lambda s: (s, 0, 0)),            # fwd proj
            pl.BlockSpec((TS, B, G), lambda s: (nS - 1 - s, 0, 0)),   # bwd proj
            pl.BlockSpec((2, B, H), lambda s: (0, 0, 0)),
            pl.BlockSpec((2, B, H), lambda s: (0, 0, 0)),
            pl.BlockSpec((H, 8 * H), lambda s: (0, 0)),
            pl.BlockSpec((1, G), lambda s: (0, 0)),
            pl.BlockSpec((1, G), lambda s: (0, 0)),
            pl.BlockSpec((H, Lat), lambda s: (0, 0)),
            pl.BlockSpec((H, Lat), lambda s: (0, 0)),
            pl.BlockSpec((1, Lat), lambda s: (0, 0)),
            pl.BlockSpec((H, Lat), lambda s: (0, 0)),
            pl.BlockSpec((H, Lat), lambda s: (0, 0)),
            pl.BlockSpec((1, Lat), lambda s: (0, 0)),
            pl.BlockSpec((B, Lat), lambda s: (0, 0)),
        ],
        out_specs=(
            pl.BlockSpec((B, Lat), lambda s: (0, 0)),
            pl.BlockSpec((1, 1), lambda s: (0, 0)),
            pl.BlockSpec((2, B, H), lambda s: (0, 0, 0)),
            pl.BlockSpec((2, B, H), lambda s: (0, 0, 0)),
        ),
        scratch_shapes=[pltpu.VMEM((2 * B, H), jnp.float32),
                        pltpu.VMEM((2 * B, H), jnp.float32)],
        compiler_params=_cparams("arbitrary"),
    )(xpf_tm, xpb_tm, h0, c0, whh_cat_bf, b_f, b_b,
      mwf_bf, mwb_bf, mu_b, lwf_bf, lwb_bf, ls_b, eps)


# ----------------------------------------------------------------------------
# Decoder LSTM recurrence, streamed over S.  The input projection (x @ Wih_x)
# is precomputed; the z contribution (z @ Wih_z + b) is computed once at the
# first grid step and held in scratch.  Each step does h @ Whh + gate math and
# stores h_t; the vocab projection happens in the batched kernels below.
# ----------------------------------------------------------------------------
def decoder_lstm(pre_tm, z, h0, c0, wz_bf, whh_bf, b):
    S, B, G = pre_tm.shape              # G = 4H
    H = G // 4
    TS = _seq_tile(S)
    nS = S // TS

    def kernel(pre_ref, z_ref, h0_ref, c0_ref, wz_ref, whh_ref, b_ref,
               hseq_ref, hN_ref, cN_ref, h_sc, c_sc, zg_sc):
        s = pl.program_id(0)

        @pl.when(s == 0)
        def _():
            h_sc[...] = h0_ref[0]
            c_sc[...] = c0_ref[0]
            zg_sc[...] = (jnp.dot(z_ref[...].astype(jnp.bfloat16), wz_ref[...],
                                  preferred_element_type=jnp.float32)
                          + b_ref[...])

        whh = whh_ref[...]
        zg = zg_sc[...]

        def body(k, carry):
            h, c = carry
            gates = (pre_ref[k] + zg
                     + jnp.dot(h.astype(jnp.bfloat16), whh,
                               preferred_element_type=jnp.float32))
            i = jax.nn.sigmoid(gates[:, 0:H])
            f = jax.nn.sigmoid(gates[:, H:2 * H])
            g = jnp.tanh(gates[:, 2 * H:3 * H])
            o = jax.nn.sigmoid(gates[:, 3 * H:4 * H])
            c_new = f * c + i * g
            h_new = o * jnp.tanh(c_new)
            hseq_ref[k] = h_new
            return h_new, c_new

        h, c = jax.lax.fori_loop(0, TS, body, (h_sc[...], c_sc[...]),
                                 unroll=True)
        h_sc[...] = h
        c_sc[...] = c
        hN_ref[0] = h
        cN_ref[0] = c

    return pl.pallas_call(
        kernel,
        out_shape=(
            jax.ShapeDtypeStruct((S, B, H), jnp.float32),
            jax.ShapeDtypeStruct((1, B, H), jnp.float32),
            jax.ShapeDtypeStruct((1, B, H), jnp.float32),
        ),
        grid=(nS,),
        in_specs=[
            pl.BlockSpec((TS, B, G), lambda s: (s, 0, 0)),
            pl.BlockSpec(z.shape, lambda s: (0, 0)),
            pl.BlockSpec((1, B, H), lambda s: (0, 0, 0)),
            pl.BlockSpec((1, B, H), lambda s: (0, 0, 0)),
            pl.BlockSpec(wz_bf.shape, lambda s: (0, 0)),
            pl.BlockSpec((H, G), lambda s: (0, 0)),
            pl.BlockSpec((1, G), lambda s: (0, 0)),
        ],
        out_specs=(
            pl.BlockSpec((TS, B, H), lambda s: (s, 0, 0)),
            pl.BlockSpec((1, B, H), lambda s: (0, 0, 0)),
            pl.BlockSpec((1, B, H), lambda s: (0, 0, 0)),
        ),
        scratch_shapes=[pltpu.VMEM((B, H), jnp.float32),
                        pltpu.VMEM((B, H), jnp.float32),
                        pltpu.VMEM((B, G), jnp.float32)],
        compiler_params=_cparams("arbitrary"),
    )(pre_tm, z, h0, c0, wz_bf, whh_bf, b)


# ----------------------------------------------------------------------------
# Vocab projection + log_softmax, tiled over V with a two-pass scheme:
#   pass 1: per-row online max / sum-exp across V tiles -> lse = m + log(l)
#   pass 2: recompute each logits tile and emit logits - lse.
# Rows are tiled too; the (H,V) weight never has to be VMEM-resident in full.
# ----------------------------------------------------------------------------
def vocab_logsumexp(h2d, w_bf, b):
    rows, H = h2d.shape
    V = w_bf.shape[1]
    TR = _row_tile(rows)
    TV = _col_tile(V)
    nV = V // TV

    def kernel(h_ref, w_ref, b_ref, lse_ref, m_sc, l_sc):
        j = pl.program_id(1)

        @pl.when(j == 0)
        def _():
            m_sc[...] = jnp.full((TR, 1), -1e30, jnp.float32)
            l_sc[...] = jnp.zeros((TR, 1), jnp.float32)

        logits = (jnp.dot(h_ref[...].astype(jnp.bfloat16), w_ref[...],
                          preferred_element_type=jnp.float32) + b_ref[...])
        m_new = jnp.maximum(m_sc[...], jnp.max(logits, axis=-1, keepdims=True))
        l_sc[...] = (l_sc[...] * jnp.exp(m_sc[...] - m_new)
                     + jnp.sum(jnp.exp(logits - m_new), axis=-1, keepdims=True))
        m_sc[...] = m_new

        @pl.when(j == nV - 1)
        def _():
            lse_ref[...] = m_sc[...] + jnp.log(l_sc[...])

    return pl.pallas_call(
        kernel,
        out_shape=jax.ShapeDtypeStruct((rows, 1), jnp.float32),
        grid=(rows // TR, nV),
        in_specs=[pl.BlockSpec((TR, H), lambda i, j: (i, 0)),
                  pl.BlockSpec((H, TV), lambda i, j: (0, j)),
                  pl.BlockSpec((1, TV), lambda i, j: (0, j))],
        out_specs=pl.BlockSpec((TR, 1), lambda i, j: (i, 0)),
        scratch_shapes=[pltpu.VMEM((TR, 1), jnp.float32),
                        pltpu.VMEM((TR, 1), jnp.float32)],
        compiler_params=_cparams("parallel", "arbitrary"),
    )(h2d, w_bf, b)


def vocab_emit(h2d, w_bf, b, lse):
    rows, H = h2d.shape
    V = w_bf.shape[1]
    TR = _row_tile(rows)
    TV = _col_tile(V)

    def kernel(h_ref, w_ref, b_ref, lse_ref, o_ref):
        logits = (jnp.dot(h_ref[...].astype(jnp.bfloat16), w_ref[...],
                          preferred_element_type=jnp.float32) + b_ref[...])
        o_ref[...] = logits - lse_ref[...]

    return pl.pallas_call(
        kernel,
        out_shape=jax.ShapeDtypeStruct((rows, V), jnp.float32),
        grid=(rows // TR, V // TV),
        in_specs=[pl.BlockSpec((TR, H), lambda i, j: (i, 0)),
                  pl.BlockSpec((H, TV), lambda i, j: (0, j)),
                  pl.BlockSpec((1, TV), lambda i, j: (0, j)),
                  pl.BlockSpec((TR, 1), lambda i, j: (i, 0))],
        out_specs=pl.BlockSpec((TR, TV), lambda i, j: (i, j)),
        compiler_params=_cparams("parallel", "parallel"),
    )(h2d, w_bf, b, lse)


# ----------------------------------------------------------------------------
# Full VAE forward (glue around the Pallas kernels).
# ----------------------------------------------------------------------------
def vae_forward(params, enc_input, dec_input, enc_hidden, dec_hidden, eps):
    B, S = enc_input.shape
    H_enc = params["enc_whh_f"].shape[0]
    H_dec = params["dec_whh"].shape[0]

    bf = lambda x: x.astype(jnp.bfloat16)

    # bf16 copies of MXU-facing weights (accumulation stays f32).
    hw_wn = bf(params["hw_wn"])
    hw_wg = bf(params["hw_wg"])
    enc_wih_f = bf(params["enc_wih_f"])
    enc_wih_b = bf(params["enc_wih_b"])
    enc_whh_cat = bf(jnp.concatenate([params["enc_whh_f"],
                                      params["enc_whh_b"]], axis=1))  # (H, 8H)
    mu_w_f = bf(params["mu_w"][:H_enc])
    mu_w_b = bf(params["mu_w"][H_enc:])
    ls_w_f = bf(params["ls_w"][:H_enc])
    ls_w_b = bf(params["ls_w"][H_enc:])
    dec_wih_x = bf(params["dec_wih_x"])
    dec_wih_z = bf(params["dec_wih_z"])
    dec_whh = bf(params["dec_whh"])
    lr_w = bf(params["lr_w"])

    # Embedding gathers directly in time-major flattened (S*B, E) order.
    enc_emb = jnp.take(params["lookup"], enc_input.T.reshape(-1), axis=0)
    dec_emb = jnp.take(params["lookup"], dec_input.T.reshape(-1), axis=0)

    # Highway + encoder input projections (dropout -> identity), row-tiled.
    xpf, xpb = highway_encproj(enc_emb, hw_wn, params["hw_bn"],
                               hw_wg, params["hw_bg"], enc_wih_f, enc_wih_b)
    xpf = xpf.reshape(S, B, 4 * H_enc)
    xpb = xpb.reshape(S, B, 4 * H_enc)

    # Streamed bi-LSTM encoder fused with the gaussian head.
    z, latent_loss, enc_h, enc_c = encoder_gaussian(
        xpf, xpb, enc_hidden[0], enc_hidden[1], enc_whh_cat,
        params["enc_b_f"], params["enc_b_b"],
        mu_w_f, mu_w_b, params["mu_b"], ls_w_f, ls_w_b, params["ls_b"], eps)

    # Decoder: hoisted input projection, then the streamed recurrence.
    dec_pre = matmul_rows(dec_emb, dec_wih_x).reshape(S, B, 4 * H_dec)
    h_seq, dec_h, dec_c = decoder_lstm(
        dec_pre, z, dec_hidden[0], dec_hidden[1],
        dec_wih_z, dec_whh, params["dec_b"])

    # Vocab projection + log_softmax in PyTorch (B*S, V) order.
    h_bs = jnp.transpose(h_seq, (1, 0, 2)).reshape(B * S, H_dec)
    lse = vocab_logsumexp(h_bs, lr_w, params["lr_b"])
    dec = vocab_emit(h_bs, lr_w, params["lr_b"], lse)

    return dec, latent_loss[0, 0], (enc_h, enc_c), (dec_h, dec_c)


def init_params(key, vocab, embed, hw_layers, enc_h, dec_h, latent):
    ks = iter(jax.random.split(key, 32))

    def u(shape, scale=0.1):
        return jax.random.uniform(next(ks), shape, jnp.float32, -scale, scale)

    p = {}
    p["lookup"] = jax.random.normal(next(ks), (vocab, embed), jnp.float32) * 0.1
    # Highway
    p["hw_wn"] = u((hw_layers, embed, embed))
    p["hw_bn"] = u((hw_layers, 1, embed))
    p["hw_wg"] = u((hw_layers, embed, embed))
    p["hw_bg"] = u((hw_layers, 1, embed))
    # Encoder (fwd / bwd); bias = b_ih + b_hh folded; gate order i,f,g,o.
    for d in ("f", "b"):
        p[f"enc_wih_{d}"] = u((embed, 4 * enc_h))
        p[f"enc_whh_{d}"] = u((enc_h, 4 * enc_h))
        p[f"enc_b_{d}"] = u((1, 4 * enc_h))
    # Latent heads.
    p["mu_w"] = u((2 * enc_h, latent))
    p["mu_b"] = jnp.zeros((1, latent), jnp.float32)
    p["ls_w"] = u((2 * enc_h, latent))
    p["ls_b"] = jnp.zeros((1, latent), jnp.float32)
    # Decoder LSTM (input = embed + latent, split into x / z parts).
    p["dec_wih_x"] = u((embed, 4 * dec_h))
    p["dec_wih_z"] = u((latent, 4 * dec_h))
    p["dec_whh"] = u((dec_h, 4 * dec_h))
    p["dec_b"] = u((1, 4 * dec_h))
    # Output projection (lr): uniform(-0.1, 0.1), bias 0 (as in _init_weight).
    p["lr_w"] = u((dec_h, vocab))
    p["lr_b"] = jnp.zeros((1, vocab), jnp.float32)
    return p


if __name__ == "__main__":
    # Small deterministic config (VOCAB=384 exercises the V-tiled log-softmax,
    # S=8 with TS=4 exercises the streamed recurrences).
    B, S = 2, 8
    VOCAB, EMBED = 384, 16
    HW_LAYERS = 2
    ENC_H, DEC_H = 32, 32
    LATENT = 8

    key = jax.random.PRNGKey(0)
    k_par, k_enc, k_dec, k_eps = jax.random.split(key, 4)

    params = init_params(k_par, VOCAB, EMBED, HW_LAYERS, ENC_H, DEC_H, LATENT)

    enc_input = jax.random.randint(k_enc, (B, S), 0, VOCAB, dtype=jnp.int32)
    dec_input = jax.random.randint(k_dec, (B, S), 0, VOCAB, dtype=jnp.int32)
    eps = jax.random.normal(k_eps, (B, LATENT), jnp.float32)

    enc_hidden = (jnp.zeros((2, B, ENC_H), jnp.float32),
                  jnp.zeros((2, B, ENC_H), jnp.float32))
    dec_hidden = (jnp.zeros((1, B, DEC_H), jnp.float32),
                  jnp.zeros((1, B, DEC_H), jnp.float32))

    dec, latent_loss, enc_hid_out, dec_hid_out = vae_forward(
        params, enc_input, dec_input, enc_hidden, dec_hidden, eps)

    jax.block_until_ready((dec, latent_loss, enc_hid_out, dec_hid_out))

    assert dec.shape == (B * S, VOCAB)
    assert enc_hid_out[0].shape == (2, B, ENC_H)
    assert dec_hid_out[0].shape == (1, B, DEC_H)
    # log_softmax rows should sum to ~1 in prob space.
    assert jnp.allclose(jnp.sum(jnp.exp(dec), axis=-1), 1.0, atol=1e-4)
    assert bool(jnp.isfinite(latent_loss))

    print("KERNEL_OK")
</pallas_src>

<mosaic_0001>
module attributes {stable_mosaic.version = 11 : i64} {
  func.func @kernel(%arg0: i32, %arg1: memref<16x16xf32, #tpu.memory_space<vmem>>, %arg2: memref<2x16x16xbf16, #tpu.memory_space<vmem>>, %arg3: memref<2x1x16xf32, #tpu.memory_space<vmem>>, %arg4: memref<2x16x16xbf16, #tpu.memory_space<vmem>>, %arg5: memref<2x1x16xf32, #tpu.memory_space<vmem>>, %arg6: memref<16x128xbf16, #tpu.memory_space<vmem>>, %arg7: memref<16x128xbf16, #tpu.memory_space<vmem>>, %arg8: memref<16x128xf32, #tpu.memory_space<vmem>>, %arg9: memref<16x128xf32, #tpu.memory_space<vmem>>) attributes {dimension_semantics = [#tpu.dimension_semantics<parallel>], iteration_bounds = array<i64: 1>, scalar_prefetch = 0 : i64, scratch_operands = 0 : i64, tpu.core_type = #tpu.core_type<tc>, window_params = [{transform_indices = @transform_0, window_bounds = array<i64: 16, 16>}, {pipeline_mode = #tpu.pipeline_mode<synchronous>, transform_indices = @transform_1, window_bounds = array<i64: 2, 16, 16>}, {pipeline_mode = #tpu.pipeline_mode<synchronous>, transform_indices = @transform_2, window_bounds = array<i64: 2, 1, 16>}, {pipeline_mode = #tpu.pipeline_mode<synchronous>, transform_indices = @transform_3, window_bounds = array<i64: 2, 16, 16>}, {pipeline_mode = #tpu.pipeline_mode<synchronous>, transform_indices = @transform_4, window_bounds = array<i64: 2, 1, 16>}, {pipeline_mode = #tpu.pipeline_mode<synchronous>, transform_indices = @transform_5, window_bounds = array<i64: 16, 128>}, {pipeline_mode = #tpu.pipeline_mode<synchronous>, transform_indices = @transform_6, window_bounds = array<i64: 16, 128>}, {transform_indices = @transform_7, window_bounds = array<i64: 16, 128>}, {transform_indices = @transform_8, window_bounds = array<i64: 16, 128>}]} {
    %c0 = arith.constant 0 : index
    %c0_0 = arith.constant 0 : index
    %0 = vector.load %arg1[%c0, %c0_0] : memref<16x16xf32, #tpu.memory_space<vmem>>, vector<16x16xf32>
    %1 = arith.truncf %0 : vector<16x16xf32> to vector<16x16xbf16>
    %c0_1 = arith.constant 0 : index
    %c0_2 = arith.constant 0 : index
    %c0_3 = arith.constant 0 : index
    %2 = vector.load %arg2[%c0_1, %c0_2, %c0_3] : memref<2x16x16xbf16, #tpu.memory_space<vmem>>, vector<1x16x16xbf16>
    %3 = vector.shape_cast %2 : vector<1x16x16xbf16> to vector<16x16xbf16>
    %cst = arith.constant dense<0.000000e+00> : vector<16x16xf32>
    %4 = tpu.matmul %1, %3, %cst {dimension_numbers = #tpu.dot_dimension_numbers<[1], [0], [0], [1], [0, 0, 1, 1], [], []>} : vector<16x16xbf16>, vector<16x16xbf16>, vector<16x16xf32> -> vector<16x16xf32>
    %c0_4 = arith.constant 0 : index
    %c0_5 = arith.constant 0 : index
    %c0_6 = arith.constant 0 : index
    %5 = vector.load %arg3[%c0_4, %c0_5, %c0_6] : memref<2x1x16xf32, #tpu.memory_space<vmem>>, vector<1x1x16xf32>
    %6 = vector.shape_cast %5 : vector<1x1x16xf32> to vector<1x16xf32>
    %7 = vector.broadcast %6 : vector<1x16xf32> to vector<16x16xf32>
    %8 = arith.addf %4, %7 : vector<16x16xf32>
    %cst_7 = arith.constant 0.000000e+00 : f32
    %9 = vector.broadcast %cst_7 : f32 to vector<16x16xf32>
    %10 = arith.maximumf %8, %9 : vector<16x16xf32>
    %c0_8 = arith.constant 0 : index
    %c0_9 = arith.constant 0 : index
    %c0_10 = arith.constant 0 : index
    %11 = vector.load %arg4[%c0_8, %c0_9, %c0_10] : memref<2x16x16xbf16, #tpu.memory_space<vmem>>, vector<1x16x16xbf16>
    %12 = vector.shape_cast %11 : vector<1x16x16xbf16> to vector<16x16xbf16>
    %cst_11 = arith.constant dense<0.000000e+00> : vector<16x16xf32>
    %13 = tpu.matmul %1, %12, %cst_11 {dimension_numbers = #tpu.dot_dimension_numbers<[1], [0], [0], [1], [0, 0, 1, 1], [], []>} : vector<16x16xbf16>, vector<16x16xbf16>, vector<16x16xf32> -> vector<16x16xf32>
    %c0_12 = arith.constant 0 : index
    %c0_13 = arith.constant 0 : index
    %c0_14 = arith.constant 0 : index
    %14 = vector.load %arg5[%c0_12, %c0_13, %c0_14] : memref<2x1x16xf32, #tpu.memory_space<vmem>>, vector<1x1x16xf32>
    %15 = vector.shape_cast %14 : vector<1x1x16xf32> to vector<1x16xf32>
    %16 = vector.broadcast %15 : vector<1x16xf32> to vector<16x16xf32>
    %17 = arith.addf %13, %16 : vector<16x16xf32>
    %18 = arith.negf %17 : vector<16x16xf32>
    %19 = math.exp %18 : vector<16x16xf32>
    %cst_15 = arith.constant 1.000000e+00 : f32
    %20 = vector.broadcast %cst_15 : f32 to vector<16x16xf32>
    %21 = arith.addf %20, %19 : vector<16x16xf32>
    %22 = arith.divf %20, %21 : vector<16x16xf32>
    %23 = arith.mulf %22, %10 : vector<16x16xf32>
    %cst_16 = arith.constant 1.000000e+00 : f32
    %24 = vector.broadcast %cst_16 : f32 to vector<16x16xf32>
    %25 = arith.subf %24, %22 : vector<16x16xf32>
    %26 = arith.mulf %25, %0 : vector<16x16xf32>
    %27 = arith.addf %23, %26 : vector<16x16xf32>
    %28 = arith.truncf %27 : vector<16x16xf32> to vector<16x16xbf16>
    %c1 = arith.constant 1 : index
    %c0_17 = arith.constant 0 : index
    %c0_18 = arith.constant 0 : index
    %29 = vector.load %arg2[%c1, %c0_17, %c0_18] : memref<2x16x16xbf16, #tpu.memory_space<vmem>>, vector<1x16x16xbf16>
    %30 = vector.shape_cast %29 : vector<1x16x16xbf16> to vector<16x16xbf16>
    %cst_19 = arith.constant dense<0.000000e+00> : vector<16x16xf32>
    %31 = tpu.matmul %28, %30, %cst_19 {dimension_numbers = #tpu.dot_dimension_numbers<[1], [0], [0], [1], [0, 0, 1, 1], [], []>} : vector<16x16xbf16>, vector<16x16xbf16>, vector<16x16xf32> -> vector<16x16xf32>
    %c1_20 = arith.constant 1 : index
    %c0_21 = arith.constant 0 : index
    %c0_22 = arith.constant 0 : index
    %32 = vector.load %arg3[%c1_20, %c0_21, %c0_22] : memref<2x1x16xf32, #tpu.memory_space<vmem>>, vector<1x1x16xf32>
    %33 = vector.shape_cast %32 : vector<1x1x16xf32> to vector<1x16xf32>
    %34 = vector.broadcast %33 : vector<1x16xf32> to vector<16x16xf32>
    %35 = arith.addf %31, %34 : vector<16x16xf32>
    %cst_23 = arith.constant 0.000000e+00 : f32
    %36 = vector.broadcast %cst_23 : f32 to vector<16x16xf32>
    %37 = arith.maximumf %35, %36 : vector<16x16xf32>
    %c1_24 = arith.constant 1 : index
    %c0_25 = arith.constant 0 : index
    %c0_26 = arith.constant 0 : index
    %38 = vector.load %arg4[%c1_24, %c0_25, %c0_26] : memref<2x16x16xbf16, #tpu.memory_space<vmem>>, vector<1x16x16xbf16>
    %39 = vector.shape_cast %38 : vector<1x16x16xbf16> to vector<16x16xbf16>
    %cst_27 = arith.constant dense<0.000000e+00> : vector<16x16xf32>
    %40 = tpu.matmul %28, %39, %cst_27 {dimension_numbers = #tpu.dot_dimension_numbers<[1], [0], [0], [1], [0, 0, 1, 1], [], []>} : vector<16x16xbf16>, vector<16x16xbf16>, vector<16x16xf32> -> vector<16x16xf32>
    %c1_28 = arith.constant 1 : index
    %c0_29 = arith.constant 0 : index
    %c0_30 = arith.constant 0 : index
    %41 = vector.load %arg5[%c1_28, %c0_29, %c0_30] : memref<2x1x16xf32, #tpu.memory_space<vmem>>, vector<1x1x16xf32>
    %42 = vector.shape_cast %41 : vector<1x1x16xf32> to vector<1x16xf32>
    %43 = vector.broadcast %42 : vector<1x16xf32> to vector<16x16xf32>
    %44 = arith.addf %40, %43 : vector<16x16xf32>
    %45 = arith.negf %44 : vector<16x16xf32>
    %46 = math.exp %45 : vector<16x16xf32>
    %cst_31 = arith.constant 1.000000e+00 : f32
    %47 = vector.broadcast %cst_31 : f32 to vector<16x16xf32>
    %48 = arith.addf %47, %46 : vector<16x16xf32>
    %49 = arith.divf %47, %48 : vector<16x16xf32>
    %50 = arith.mulf %49, %37 : vector<16x16xf32>
    %cst_32 = arith.constant 1.000000e+00 : f32
    %51 = vector.broadcast %cst_32 : f32 to vector<16x16xf32>
    %52 = arith.subf %51, %49 : vector<16x16xf32>
    %53 = arith.mulf %52, %27 : vector<16x16xf32>
    %54 = arith.addf %50, %53 : vector<16x16xf32>
    %55 = arith.truncf %54 : vector<16x16xf32> to vector<16x16xbf16>
    %c0_33 = arith.constant 0 : index
    %c0_34 = arith.constant 0 : index
    %56 = vector.load %arg6[%c0_33, %c0_34] : memref<16x128xbf16, #tpu.memory_space<vmem>>, vector<16x128xbf16>
    %cst_35 = arith.constant dense<0.000000e+00> : vector<16x128xf32>
    %57 = tpu.matmul %55, %56, %cst_35 {dimension_numbers = #tpu.dot_dimension_numbers<[1], [0], [0], [1], [0, 0, 1, 1], [], []>} : vector<16x16xbf16>, vector<16x128xbf16>, vector<16x128xf32> -> vector<16x128xf32>
    %c0_36 = arith.constant 0 : index
    %c0_37 = arith.constant 0 : index
    %58 = vector.load %arg8[%c0_36, %c0_37] : memref<16x128xf32, #tpu.memory_space<vmem>>, vector<16x128xf32>
    tpu.vector_store %arg8[%c0_36, %c0_37], %57 {strides = array<i32>} : memref<16x128xf32, #tpu.memory_space<vmem>>, vector<16x128xf32>,
    %c0_38 = arith.constant 0 : index
    %c0_39 = arith.constant 0 : index
    %59 = vector.load %arg7[%c0_38, %c0_39] : memref<16x128xbf16, #tpu.memory_space<vmem>>, vector<16x128xbf16>
    %cst_40 = arith.constant dense<0.000000e+00> : vector<16x128xf32>
    %60 = tpu.matmul %55, %59, %cst_40 {dimension_numbers = #tpu.dot_dimension_numbers<[1], [0], [0], [1], [0, 0, 1, 1], [], []>} : vector<16x16xbf16>, vector<16x128xbf16>, vector<16x128xf32> -> vector<16x128xf32>
    %c0_41 = arith.constant 0 : index
    %c0_42 = arith.constant 0 : index
    %61 = vector.load %arg9[%c0_41, %c0_42] : memref<16x128xf32, #tpu.memory_space<vmem>>, vector<16x128xf32>
    tpu.vector_store %arg9[%c0_41, %c0_42], %60 {strides = array<i32>} : memref<16x128xf32, #tpu.memory_space<vmem>>, vector<16x128xf32>,
    return
  }
  func.func @transform_0(%arg0: i32) -> (i32, i32) {
    %c0_i32 = arith.constant 0 : i32
    %c0_i32_0 = arith.constant 0 : i32
    return %arg0, %c0_i32 : i32, i32
  }
  func.func @transform_1(%arg0: i32) -> (i32, i32, i32) {
    %c0_i32 = arith.constant 0 : i32
    %c0_i32_0 = arith.constant 0 : i32
    %c0_i32_1 = arith.constant 0 : i32
    %c0_i32_2 = arith.constant 0 : i32
    return %c0_i32, %c0_i32_0, %c0_i32_1 : i32, i32, i32
  }
  func.func @transform_2(%arg0: i32) -> (i32, i32, i32) {
    %c0_i32 = arith.constant 0 : i32
    %c0_i32_0 = arith.constant 0 : i32
    %c0_i32_1 = arith.constant 0 : i32
    %c0_i32_2 = arith.constant 0 : i32
    return %c0_i32, %c0_i32_0, %c0_i32_1 : i32, i32, i32
  }
  func.func @transform_3(%arg0: i32) -> (i32, i32, i32) {
    %c0_i32 = arith.constant 0 : i32
    %c0_i32_0 = arith.constant 0 : i32
    %c0_i32_1 = arith.constant 0 : i32
    %c0_i32_2 = arith.constant 0 : i32
    return %c0_i32, %c0_i32_0, %c0_i32_1 : i32, i32, i32
  }
  func.func @transform_4(%arg0: i32) -> (i32, i32, i32) {
    %c0_i32 = arith.constant 0 : i32
    %c0_i32_0 = arith.constant 0 : i32
    %c0_i32_1 = arith.constant 0 : i32
    %c0_i32_2 = arith.constant 0 : i32
    return %c0_i32, %c0_i32_0, %c0_i32_1 : i32, i32, i32
  }
  func.func @transform_5(%arg0: i32) -> (i32, i32) {
    %c0_i32 = arith.constant 0 : i32
    %c0_i32_0 = arith.constant 0 : i32
    %c0_i32_1 = arith.constant 0 : i32
    return %c0_i32, %c0_i32_0 : i32, i32
  }
  func.func @transform_6(%arg0: i32) -> (i32, i32) {
    %c0_i32 = arith.constant 0 : i32
    %c0_i32_0 = arith.constant 0 : i32
    %c0_i32_1 = arith.constant 0 : i32
    return %c0_i32, %c0_i32_0 : i32, i32
  }
  func.func @transform_7(%arg0: i32) -> (i32, i32) {
    %c0_i32 = arith.constant 0 : i32
    %c0_i32_0 = arith.constant 0 : i32
    return %arg0, %c0_i32 : i32, i32
  }
  func.func @transform_8(%arg0: i32) -> (i32, i32) {
    %c0_i32 = arith.constant 0 : i32
    %c0_i32_0 = arith.constant 0 : i32
    return %arg0, %c0_i32 : i32, i32
  }
}

</mosaic_0001>

<llo_original>
// kernel: tpu_custom_call.1
$region0: #{tpu_custom_call.1}
  #allocation0 [shape = 'u32[]', space=smem, size = 0x4, offset = 0x4, fixed_abs, tag = 'smem constant byte address 0x4 - core index']
  #allocation1 [shape = 'u32[144,128]{1,0:T(1,128)}', space=vmem, size = 0x12000, scoped, tag = 'internal scratch']
  %s0 = inlined_call_operand.hbm [shape: f32[16,16], index: 0, kind: input, shape index: {}]
  %s1 = inlined_call_operand.hbm [shape: bf16[2,16,16], index: 1, kind: input, shape index: {}]
  %s2 = inlined_call_operand.hbm [shape: f32[2,1,16], index: 2, kind: input, shape index: {}]
  %s3 = inlined_call_operand.hbm [shape: bf16[2,16,16], index: 3, kind: input, shape index: {}]
  %s4 = inlined_call_operand.hbm [shape: f32[2,1,16], index: 4, kind: input, shape index: {}]
  %s5 = inlined_call_operand.vmem [shape: bf16[16,128], index: 5, kind: input, shape index: {}]
  %s6 = inlined_call_operand.hbm [shape: bf16[16,128], index: 6, kind: input, shape index: {}]
  %s7 = inlined_call_operand.hbm [shape: f32[16,128], index: 7, kind: output, shape index: {0}]
  %s8 = inlined_call_operand.hbm [shape: f32[16,128], index: 8, kind: output, shape index: {1}]
  %9 = xla_tuple %s7, %s8
  %s10 = sld [smem:[#allocation0]]
  $region70: #{tpu_custom_call.1} parent=0
    _
  %s12 = ssub.s32 1, %s10
  %s13 = scalar_select 0, %s12, %s10
  $region1: #{tpu_custom_call.1} parent=0
    #allocation2 [shape = 'u8[8192]{0}', space=vmem, size = 0x2000, scoped, tag = 'input window, operand 0, single buffered']
    #allocation3 [shape = 's32[1]{0}', space=sflag, size = 0x4, scoped, tag = 'scoped memory for tpu_custom_call.1']
    #allocation4 [shape = 's32[1]{0}', space=sflag, size = 0x4, scoped, tag = 'scoped memory for tpu_custom_call.1']
    #allocation5 [shape = 'u8[8192]{0}', space=vmem, size = 0x2000, scoped, tag = 'input window, operand 1, single buffered']
    #allocation6 [shape = 's32[1]{0}', space=sflag, size = 0x4, scoped, tag = 'scoped memory for tpu_custom_call.1']
    #allocation7 [shape = 'u8[1024]{0}', space=vmem, size = 0x400, scoped, tag = 'input window, operand 2, single buffered']
    #allocation8 [shape = 'u8[8192]{0}', space=vmem, size = 0x2000, scoped, tag = 'input window, operand 3, single buffered']
    #allocation9 [shape = 's32[1]{0}', space=sflag, size = 0x4, scoped, tag = 'scoped memory for tpu_custom_call.1']
    #allocation10 [shape = 'u8[1024]{0}', space=vmem, size = 0x400, scoped, tag = 'input window, operand 4, single buffered']
    #allocation11 [shape = 'u8[4096]{0}', space=vmem, size = 0x1000, scoped, tag = 'input window, operand 6, single buffered']
    #allocation12 [shape = 's32[1]{0}', space=sflag, size = 0x4, scoped, tag = 'scoped memory for tpu_custom_call.1']
    #allocation13 [shape = 'u8[8192]{0}', space=vmem, size = 0x2000, scoped, tag = 'output window, operand 0, single buffered']
    #allocation14 [shape = 'u8[8192]{0}', space=vmem, size = 0x2000, scoped, tag = 'output window, operand 1, single buffered']
    #allocation15 [shape = 's32[1]{0}', space=sflag, size = 0x4, scoped, tag = 'scoped memory for tpu_custom_call.1']
    %14 = vsyncpa [#allocation3], 0
    %15 = vsyncpa [#allocation6], 0
    %16 = vsyncpa [#allocation9], 0
    %17 = vsyncpa [#allocation12], 0
    %18 = vsyncpa [#allocation4], 0
    %19 = vsyncpa [#allocation15], 0
    // Predicated region
    $region2: #{tpu_custom_call.1} parent=1 // pred_check
      _
    $region3: #{tpu_custom_call.1} parent=1 // pred_check_branch
      %21 = sbr.rel (0) target = $region5
    $region4: #{tpu_custom_call.1} parent=1 // pred_region
      %s23 = ssub.s32 256, 256
      %24 = vsyncadd [#allocation3], %s23
      %s25 = sshll.u32 [#allocation2], 4
      %s26 = int_to_ptr.vmem [resolvable:$true] %s25
      %31 = dma.hbm_to_vmem [thread:$0]  %s0, 256, %s26, [#allocation3], 128, 128, 8
    $region5: #{tpu_custom_call.1} parent=1 // pred_fallthru
      _
    // Predicated region
    $region6: #{tpu_custom_call.1} parent=1 // pred_check
      _
    $region7: #{tpu_custom_call.1} parent=1 // pred_check_branch
      %33 = sbr.rel (0) target = $region9
    $region8: #{tpu_custom_call.1} parent=1 // pred_region
      %s35 = ssub.s32 256, 256
      %36 = vsyncadd [#allocation6], %s35
      %s37 = sshll.u32 [#allocation5], 4
      %s38 = int_to_ptr.vmem [resolvable:$true] %s37
      %43 = dma.hbm_to_vmem [thread:$0]  %s1, 256, %s38, [#allocation6], 64, 64, 4
    $region9: #{tpu_custom_call.1} parent=1 // pred_fallthru
      _
    // Predicated region
    $region10: #{tpu_custom_call.1} parent=1 // pred_check
      _
    $region11: #{tpu_custom_call.1} parent=1 // pred_check_branch
      %45 = sbr.rel (0) target = $region13
    $region12: #{tpu_custom_call.1} parent=1 // pred_region
      %s47 = ssub.s32 32, 32
      %48 = vsyncadd [#allocation6], %s47
      %s49 = sshll.u32 [#allocation7], 4
      %s50 = int_to_ptr.vmem [resolvable:$true] %s49
      %55 = dma.hbm_to_vmem [thread:$0]  %s2, 32, %s50, [#allocation6], 16, 16, 1
    $region13: #{tpu_custom_call.1} parent=1 // pred_fallthru
      _
    // Predicated region
    $region14: #{tpu_custom_call.1} parent=1 // pred_check
      _
    $region15: #{tpu_custom_call.1} parent=1 // pred_check_branch
      %57 = sbr.rel (0) target = $region17
    $region16: #{tpu_custom_call.1} parent=1 // pred_region
      %s59 = ssub.s32 256, 256
      %60 = vsyncadd [#allocation9], %s59
      %s61 = sshll.u32 [#allocation8], 4
      %s62 = int_to_ptr.vmem [resolvable:$true] %s61
      %67 = dma.hbm_to_vmem [thread:$0]  %s3, 256, %s62, [#allocation9], 64, 64, 4
    $region17: #{tpu_custom_call.1} parent=1 // pred_fallthru
      _
    // Predicated region
    $region18: #{tpu_custom_call.1} parent=1 // pred_check
      _
    $region19: #{tpu_custom_call.1} parent=1 // pred_check_branch
      %69 = sbr.rel (0) target = $region21
    $region20: #{tpu_custom_call.1} parent=1 // pred_region
      %s71 = ssub.s32 32, 32
      %72 = vsyncadd [#allocation9], %s71
      %s73 = sshll.u32 [#allocation10], 4
      %s74 = int_to_ptr.vmem [resolvable:$true] %s73
      %79 = dma.hbm_to_vmem [thread:$0]  %s4, 32, %s74, [#allocation9], 16, 16, 1
    $region21: #{tpu_custom_call.1} parent=1 // pred_fallthru
      _
    // Predicated region
    $region22: #{tpu_custom_call.1} parent=1 // pred_check
      _
    $region23: #{tpu_custom_call.1} parent=1 // pred_check_branch
      %81 = sbr.rel (0) target = $region25
    $region24: #{tpu_custom_call.1} parent=1 // pred_region
      _
    $region25: #{tpu_custom_call.1} parent=1 // pred_fallthru
      _
    // Predicated region
    $region26: #{tpu_custom_call.1} parent=1 // pred_check
      _
    $region27: #{tpu_custom_call.1} parent=1 // pred_check_branch
      %83 = sbr.rel (0) target = $region29
    $region28: #{tpu_custom_call.1} parent=1 // pred_region
      %s85 = ssub.s32 128, 128
      %86 = vsyncadd [#allocation12], %s85
      %s87 = sshll.u32 [#allocation11], 4
      %s88 = int_to_ptr.vmem [resolvable:$true] %s87
      %93 = dma.hbm_to_vmem [thread:$0]  %s6, 128, %s88, [#allocation12], 64, 64, 4
    $region29: #{tpu_custom_call.1} parent=1 // pred_fallthru
      _
    // Predicated region
    $region30: #{tpu_custom_call.1} parent=1 // pred_check
      _
    $region31: #{tpu_custom_call.1} parent=1 // pred_check_branch
      %95 = sbr.rel (0) target = $region33
    $region32: #{tpu_custom_call.1} parent=1 // pred_region
      %96 = dma.done [#allocation3], 256
    $region33: #{tpu_custom_call.1} parent=1 // pred_fallthru
      _
    // Predicated region
    $region34: #{tpu_custom_call.1} parent=1 // pred_check
      _
    $region35: #{tpu_custom_call.1} parent=1 // pred_check_branch
      %98 = sbr.rel (0) target = $region37
    $region36: #{tpu_custom_call.1} parent=1 // pred_region
      %99 = dma.done [#allocation6], 256
    $region37: #{tpu_custom_call.1} parent=1 // pred_fallthru
      _
    // Predicated region
    $region38: #{tpu_custom_call.1} parent=1 // pred_check
      _
    $region39: #{tpu_custom_call.1} parent=1 // pred_check_branch
      %101 = sbr.rel (0) target = $region41
    $region40: #{tpu_custom_call.1} parent=1 // pred_region
      %102 = dma.done [#allocation6], 32
    $region41: #{tpu_custom_call.1} parent=1 // pred_fallthru
      _
    // Predicated region
    $region42: #{tpu_custom_call.1} parent=1 // pred_check
      _
    $region43: #{tpu_custom_call.1} parent=1 // pred_check_branch
      %104 = sbr.rel (0) target = $region45
    $region44: #{tpu_custom_call.1} parent=1 // pred_region
      %105 = dma.done [#allocation9], 256
    $region45: #{tpu_custom_call.1} parent=1 // pred_fallthru
      _
    // Predicated region
    $region46: #{tpu_custom_call.1} parent=1 // pred_check
      _
    $region47: #{tpu_custom_call.1} parent=1 // pred_check_branch
      %107 = sbr.rel (0) target = $region49
    $region48: #{tpu_custom_call.1} parent=1 // pred_region
      %108 = dma.done [#allocation9], 32
    $region49: #{tpu_custom_call.1} parent=1 // pred_fallthru
      _
    // Predicated region
    $region50: #{tpu_custom_call.1} parent=1 // pred_check
      _
    $region51: #{tpu_custom_call.1} parent=1 // pred_check_branch
      %110 = sbr.rel (0) target = $region53
    $region52: #{tpu_custom_call.1} parent=1 // pred_region
      %111 = dma.done [#allocation12], 128
    $region53: #{tpu_custom_call.1} parent=1 // pred_fallthru
      _
    %v113 = vld [vmem:[#allocation2] sm:$0xff]
    %v114 = vld [vmem:[#allocation2 + $0x8] sm:$0xff]
    %v115 = vpack.c.bf16 %v114, %v113
    %v116 = vld [vmem:[#allocation5] sm:$0xf]
    %v117 = vld [vmem:[#allocation5 + $0x4] sm:$0xf]
    %v118 = vld [vmem:[#allocation7] sm:$0x1]
    %v120 = vlaneseq
    %v121 = vshrl.u32 %v120, 7
    %v122 = vsub.s32 0, %v121
    %v123 = vrot.slane %v118, %v122
    %v127 = vunpack.c.l.b16 %v116
    %v128 = vunpack.c.l.b16 %v117
    %v129 = vpack.c.b16 %v128, %v127
    %vm131 = vcmask 130048
    %v133 = vsel %vm131, %v115, 0
    %135 = vmatprep.subr.bf16.mxu0 0
    %136 = vmatpush1.bf16.msra.mxu0 0
    %137 = vmatprep.subr.bf16.mxu0 0
    %138 = vmatpush1.bf16.msra.mxu0 0
    %139 = vmatprep.subr.bf16.mxu0 0
    %140 = vmatpush1.bf16.msra.mxu0 0
    %141 = vmatprep.subr.bf16.mxu0 0
    %142 = vmatpush1.bf16.msra.mxu0 0
    %143 = vmatprep.subr.bf16.mxu0 0
    %144 = vmatpush1.bf16.msra.mxu0 0
    %145 = vmatprep.subr.bf16.mxu0 0
    %146 = vmatpush1.bf16.msra.mxu0 0
    %147 = vmatprep.subr.bf16.mxu0 0
    %148 = vmatpush1.bf16.msra.mxu0 0
    %149 = vmatprep.subr.bf16.mxu0 0
    %150 = vmatpush1.bf16.msra.mxu0 %v129
    %151 = vmatprep.subr.bf16.mxu0 0
    %152 = vmatpush2.bf16.msra.mxu0 0
    %153 = vmatprep.subr.bf16.mxu0 0
    %154 = vmatpush2.bf16.msra.mxu0 0
    %155 = vmatprep.subr.bf16.mxu0 0
    %156 = vmatpush2.bf16.msra.mxu0 0
    %157 = vmatprep.subr.bf16.mxu0 0
    %158 = vmatpush2.bf16.msra.mxu0 0
    %159 = vmatprep.subr.bf16.mxu0 0
    %160 = vmatpush2.bf16.msra.mxu0 0
    %161 = vmatprep.subr.bf16.mxu0 0
    %162 = vmatpush2.bf16.msra.mxu0 0
    %163 = vmatprep.subr.bf16.mxu0 0
    %164 = vmatpush2.bf16.msra.mxu0 0
    %165 = vmatprep.subr.bf16.mxu0 0
    %166 = vmatpush2.bf16.msra.mxu0 0
    %167 = vmatprep.mubr.bf16.mxu0 0
    %168 = vmatmul.mubr.bf16.gmra.mxu0 %v133
    %v169 = vpop.f32.mrf.mxu0
    %v170 = vadd.f32 %v123, %v169
    %v171 = vpop.f32.mrf.mxu0
    %v172 = vpop.f32.mrf.mxu0
    %v173 = vadd.f32 %v123, %v172
    %v174 = vpop.f32.mrf.mxu0
    %175 = vdwg.mxu0
    %v176 = vmax.f32 %v170, 0.0
    %v177 = vmax.f32 %v173, 0.0
    %v178 = vld [vmem:[#allocation8] sm:$0xf]
    %v179 = vld [vmem:[#allocation8 + $0x4] sm:$0xf]
    %v180 = vld [vmem:[#allocation10] sm:$0x1]
    %v182 = vlaneseq
    %v183 = vshrl.u32 %v182, 7
    %v184 = vsub.s32 0, %v183
    %v185 = vrot.slane %v180, %v184
    %v189 = vunpack.c.l.b16 %v178
    %v190 = vunpack.c.l.b16 %v179
    %v191 = vpack.c.b16 %v190, %v189
    %193 = vmatprep.subr.bf16.mxu0 0
    %194 = vmatpush1.bf16.msra.mxu0 0
    %195 = vmatprep.subr.bf16.mxu0 0
    %196 = vmatpush1.bf16.msra.mxu0 0
    %197 = vmatprep.subr.bf16.mxu0 0
    %198 = vmatpush1.bf16.msra.mxu0 0
    %199 = vmatprep.subr.bf16.mxu0 0
    %200 = vmatpush1.bf16.msra.mxu0 0
    %201 = vmatprep.subr.bf16.mxu0 0
    %202 = vmatpush1.bf16.msra.mxu0 0
    %203 = vmatprep.subr.bf16.mxu0 0
    %204 = vmatpush1.bf16.msra.mxu0 0
    %205 = vmatprep.subr.bf16.mxu0 0
    %206 = vmatpush1.bf16.msra.mxu0 0
    %207 = vmatprep.subr.bf16.mxu0 0
    %208 = vmatpush1.bf16.msra.mxu0 %v191
    %209 = vmatprep.subr.bf16.mxu0 0
    %210 = vmatpush2.bf16.msra.mxu0 0
    %211 = vmatprep.subr.bf16.mxu0 0
    %212 = vmatpush2.bf16.msra.mxu0 0
    %213 = vmatprep.subr.bf16.mxu0 0
    %214 = vmatpush2.bf16.msra.mxu0 0
    %215 = vmatprep.subr.bf16.mxu0 0
    %216 = vmatpush2.bf16.msra.mxu0 0
    %217 = vmatprep.subr.bf16.mxu0 0
    %218 = vmatpush2.bf16.msra.mxu0 0
    %219 = vmatprep.subr.bf16.mxu0 0
    %220 = vmatpush2.bf16.msra.mxu0 0
    %221 = vmatprep.subr.bf16.mxu0 0
    %222 = vmatpush2.bf16.msra.mxu0 0
    %223 = vmatprep.subr.bf16.mxu0 0
    %224 = vmatpush2.bf16.msra.mxu0 0
    %225 = vmatprep.mubr.bf16.mxu0 0
    %226 = vmatmul.mubr.bf16.gmra.mxu0 %v133
    %v227 = vpop.f32.mrf.mxu0
    %v228 = vadd.f32 %v185, %v227
    %v229 = vpop.f32.mrf.mxu0
    %v230 = vpop.f32.mrf.mxu0
    %v231 = vadd.f32 %v185, %v230
    %v232 = vpop.f32.mrf.mxu0
    %233 = vdwg.mxu0
    %v234 = vxor.u32 %v228, 2147483648
    %v235 = vxor.u32 %v231, 2147483648
    %v236 = vmul.f32 %v234, 1.442695
    %v237 = vpow.pop %v236
    %v238 = vmul.f32 %v235, 1.442695
    %v239 = vpow.pop %v238
    %v240 = vadd.f32 %v237, 1.0
    %v241 = vadd.f32 %v239, 1.0
    %v242 = vrcp.pop %v240
    %v243 = vmul.f32 1.0, %v242
    %v244 = vrcp.pop %v241
    %v245 = vmul.f32 1.0, %v244
    %v246 = vmul.f32 %v243, %v176
    %v247 = vmul.f32 %v245, %v177
    %v248 = vsub.f32 1.0, %v243
    %v249 = vsub.f32 1.0, %v245
    %v250 = vmul.f32 %v248, %v113
    %v251 = vmul.f32 %v249, %v114
    %v252 = vadd.f32 %v246, %v250
    %v253 = vadd.f32 %v247, %v251
    %v254 = vpack.c.bf16 %v253, %v252
    %s255 = scalar_lea.vmem [#allocation5], 8
    %v256 = vld [vmem:[%s255] sm:$0xf]
    %v257 = vld [vmem:[%s255 + $0x4] sm:$0xf]
    %s258 = scalar_lea.vmem [#allocation7], 1
    %v259 = vld [vmem:[%s258] sm:$0x1]
    %v261 = vlaneseq
    %v262 = vshrl.u32 %v261, 7
    %v263 = vsub.s32 0, %v262
    %v264 = vrot.slane %v259, %v263
    %v268 = vunpack.c.l.b16 %v256
    %v269 = vunpack.c.l.b16 %v257
    %v270 = vpack.c.b16 %v269, %v268
    %v273 = vsel %vm131, %v254, 0
    %275 = vmatprep.subr.bf16.mxu0 0
    %276 = vmatpush1.bf16.msra.mxu0 0
    %277 = vmatprep.subr.bf16.mxu0 0
    %278 = vmatpush1.bf16.msra.mxu0 0
    %279 = vmatprep.subr.bf16.mxu0 0
    %280 = vmatpush1.bf16.msra.mxu0 0
    %281 = vmatprep.subr.bf16.mxu0 0
    %282 = vmatpush1.bf16.msra.mxu0 0
    %283 = vmatprep.subr.bf16.mxu0 0
    %284 = vmatpush1.bf16.msra.mxu0 0
    %285 = vmatprep.subr.bf16.mxu0 0
    %286 = vmatpush1.bf16.msra.mxu0 0
    %287 = vmatprep.subr.bf16.mxu0 0
    %288 = vmatpush1.bf16.msra.mxu0 0
    %289 = vmatprep.subr.bf16.mxu0 0
    %290 = vmatpush1.bf16.msra.mxu0 %v270
    %291 = vmatprep.subr.bf16.mxu0 0
    %292 = vmatpush2.bf16.msra.mxu0 0
    %293 = vmatprep.subr.bf16.mxu0 0
    %294 = vmatpush2.bf16.msra.mxu0 0
    %295 = vmatprep.subr.bf16.mxu0 0
    %296 = vmatpush2.bf16.msra.mxu0 0
    %297 = vmatprep.subr.bf16.mxu0 0
    %298 = vmatpush2.bf16.msra.mxu0 0
    %299 = vmatprep.subr.bf16.mxu0 0
    %300 = vmatpush2.bf16.msra.mxu0 0
    %301 = vmatprep.subr.bf16.mxu0 0
    %302 = vmatpush2.bf16.msra.mxu0 0
    %303 = vmatprep.subr.bf16.mxu0 0
    %304 = vmatpush2.bf16.msra.mxu0 0
    %305 = vmatprep.subr.bf16.mxu0 0
    %306 = vmatpush2.bf16.msra.mxu0 0
    %307 = vmatprep.mubr.bf16.mxu0 0
    %308 = vmatmul.mubr.bf16.gmra.mxu0 %v273
    %v309 = vpop.f32.mrf.mxu0
    %v310 = vadd.f32 %v264, %v309
    %v311 = vpop.f32.mrf.mxu0
    %v312 = vpop.f32.mrf.mxu0
    %v313 = vadd.f32 %v264, %v312
    %v314 = vpop.f32.mrf.mxu0
    %315 = vdwg.mxu0
    %v316 = vmax.f32 %v310, 0.0
    %v317 = vmax.f32 %v313, 0.0
    %s318 = scalar_lea.vmem [#allocation8], 8
    %v319 = vld [vmem:[%s318] sm:$0xf]
    %v320 = vld [vmem:[%s318 + $0x4] sm:$0xf]
    %s321 = scalar_lea.vmem [#allocation10], 1
    %v322 = vld [vmem:[%s321] sm:$0x1]
    %v324 = vlaneseq
    %v325 = vshrl.u32 %v324, 7
    %v326 = vsub.s32 0, %v325
    %v327 = vrot.slane %v322, %v326
    %v331 = vunpack.c.l.b16 %v319
    %v332 = vunpack.c.l.b16 %v320
    %v333 = vpack.c.b16 %v332, %v331
    %335 = vmatprep.subr.bf16.mxu0 0
    %336 = vmatpush1.bf16.msra.mxu0 0
    %337 = vmatprep.subr.bf16.mxu0 0
    %338 = vmatpush1.bf16.msra.mxu0 0
    %339 = vmatprep.subr.bf16.mxu0 0
    %340 = vmatpush1.bf16.msra.mxu0 0
    %341 = vmatprep.subr.bf16.mxu0 0
    %342 = vmatpush1.bf16.msra.mxu0 0
    %343 = vmatprep.subr.bf16.mxu0 0
    %344 = vmatpush1.bf16.msra.mxu0 0
    %345 = vmatprep.subr.bf16.mxu0 0
    %346 = vmatpush1.bf16.msra.mxu0 0
    %347 = vmatprep.subr.bf16.mxu0 0
    %348 = vmatpush1.bf16.msra.mxu0 0
    %349 = vmatprep.subr.bf16.mxu0 0
    %350 = vmatpush1.bf16.msra.mxu0 %v333
    %351 = vmatprep.subr.bf16.mxu0 0
    %352 = vmatpush2.bf16.msra.mxu0 0
    %353 = vmatprep.subr.bf16.mxu0 0
    %354 = vmatpush2.bf16.msra.mxu0 0
    %355 = vmatprep.subr.bf16.mxu0 0
    %356 = vmatpush2.bf16.msra.mxu0 0
    %357 = vmatprep.subr.bf16.mxu0 0
    %358 = vmatpush2.bf16.msra.mxu0 0
    %359 = vmatprep.subr.bf16.mxu0 0
    %360 = vmatpush2.bf16.msra.mxu0 0
    %361 = vmatprep.subr.bf16.mxu0 0
    %362 = vmatpush2.bf16.msra.mxu0 0
    %363 = vmatprep.subr.bf16.mxu0 0
    %364 = vmatpush2.bf16.msra.mxu0 0
    %365 = vmatprep.subr.bf16.mxu0 0
    %366 = vmatpush2.bf16.msra.mxu0 0
    %367 = vmatprep.mubr.bf16.mxu0 0
    %368 = vmatmul.mubr.bf16.gmra.mxu0 %v273
    %v369 = vpop.f32.mrf.mxu0
    %v370 = vadd.f32 %v327, %v369
    %v371 = vpop.f32.mrf.mxu0
    %v372 = vpop.f32.mrf.mxu0
    %v373 = vadd.f32 %v327, %v372
    %v374 = vpop.f32.mrf.mxu0
    %375 = vdwg.mxu0
    %v376 = vxor.u32 %v370, 2147483648
    %v377 = vxor.u32 %v373, 2147483648
    %v378 = vmul.f32 %v376, 1.442695
    %v379 = vpow.pop %v378
    %v380 = vmul.f32 %v377, 1.442695
    %v381 = vpow.pop %v380
    %v382 = vadd.f32 %v379, 1.0
    %v383 = vadd.f32 %v381, 1.0
    %v384 = vrcp.pop %v382
    %v385 = vmul.f32 1.0, %v384
    %v386 = vrcp.pop %v383
    %v387 = vmul.f32 1.0, %v386
    %v388 = vmul.f32 %v385, %v316
    %v389 = vmul.f32 %v387, %v317
    %v390 = vsub.f32 1.0, %v385
    %v391 = vsub.f32 1.0, %v387
    %v392 = vmul.f32 %v390, %v252
    %v393 = vmul.f32 %v391, %v253
    %v394 = vadd.f32 %v388, %v392
    %v395 = vadd.f32 %v389, %v393
    %v396 = vpack.c.bf16 %v395, %v394
    %v397 = vld [vmem:[%s5] sm:$0xf]
    %v398 = vld [vmem:[%s5 + $0x4] sm:$0xf]
    %v401 = vunpack.c.l.b16 %v397
    %v402 = vunpack.c.l.b16 %v398
    %v403 = vpack.c.b16 %v402, %v401
    %v406 = vsel %vm131, %v396, 0
    %408 = vmatprep.subr.bf16.mxu0 0
    %409 = vmatpush1.bf16.msra.mxu0 0
    %410 = vmatprep.subr.bf16.mxu0 0
    %411 = vmatpush1.bf16.msra.mxu0 0
    %412 = vmatprep.subr.bf16.mxu0 0
    %413 = vmatpush1.bf16.msra.mxu0 0
    %414 = vmatprep.subr.bf16.mxu0 0
    %415 = vmatpush1.bf16.msra.mxu0 0
    %416 = vmatprep.subr.bf16.mxu0 0
    %417 = vmatpush1.bf16.msra.mxu0 0
    %418 = vmatprep.subr.bf16.mxu0 0
    %419 = vmatpush1.bf16.msra.mxu0 0
    %420 = vmatprep.subr.bf16.mxu0 0
    %421 = vmatpush1.bf16.msra.mxu0 0
    %422 = vmatprep.subr.bf16.mxu0 0
    %423 = vmatpush1.bf16.msra.mxu0 %v403
    %424 = vmatprep.subr.bf16.mxu0 0
    %425 = vmatpush2.bf16.msra.mxu0 0
    %426 = vmatprep.subr.bf16.mxu0 0
    %427 = vmatpush2.bf16.msra.mxu0 0
    %428 = vmatprep.subr.bf16.mxu0 0
    %429 = vmatpush2.bf16.msra.mxu0 0
    %430 = vmatprep.subr.bf16.mxu0 0
    %431 = vmatpush2.bf16.msra.mxu0 0
    %432 = vmatprep.subr.bf16.mxu0 0
    %433 = vmatpush2.bf16.msra.mxu0 0
    %434 = vmatprep.subr.bf16.mxu0 0
    %435 = vmatpush2.bf16.msra.mxu0 0
    %436 = vmatprep.subr.bf16.mxu0 0
    %437 = vmatpush2.bf16.msra.mxu0 0
    %438 = vmatprep.subr.bf16.mxu0 0
    %439 = vmatpush2.bf16.msra.mxu0 0
    %440 = vmatprep.mubr.bf16.mxu0 0
    %441 = vmatmul.mubr.bf16.gmra.mxu0 %v406
    %v442 = vpop.f32.mrf.mxu0
    %v443 = vadd.f32 0.0, %v442
    %v444 = vpop.f32.mrf.mxu0
    %v445 = vpop.f32.mrf.mxu0
    %v446 = vadd.f32 0.0, %v445
    %v447 = vpop.f32.mrf.mxu0
    %448 = vdwg.mxu0
    %449 = vst [vmem:[#allocation13] sm:$0xff] %v443
    %450 = vst [vmem:[#allocation13 + $0x8] sm:$0xff] %v446
    %v451 = vld [vmem:[#allocation11] sm:$0xf]
    %v452 = vld [vmem:[#allocation11 + $0x4] sm:$0xf]
    %v455 = vunpack.c.l.b16 %v451
    %v456 = vunpack.c.l.b16 %v452
    %v457 = vpack.c.b16 %v456, %v455
    %459 = vmatprep.subr.bf16.mxu0 0
    %460 = vmatpush1.bf16.msra.mxu0 0
    %461 = vmatprep.subr.bf16.mxu0 0
    %462 = vmatpush1.bf16.msra.mxu0 0
    %463 = vmatprep.subr.bf16.mxu0 0
    %464 = vmatpush1.bf16.msra.mxu0 0
    %465 = vmatprep.subr.bf16.mxu0 0
    %466 = vmatpush1.bf16.msra.mxu0 0
    %467 = vmatprep.subr.bf16.mxu0 0
    %468 = vmatpush1.bf16.msra.mxu0 0
    %469 = vmatprep.subr.bf16.mxu0 0
    %470 = vmatpush1.bf16.msra.mxu0 0
    %471 = vmatprep.subr.bf16.mxu0 0
    %472 = vmatpush1.bf16.msra.mxu0 0
    %473 = vmatprep.subr.bf16.mxu0 0
    %474 = vmatpush1.bf16.msra.mxu0 %v457
    %475 = vmatprep.subr.bf16.mxu0 0
    %476 = vmatpush2.bf16.msra.mxu0 0
    %477 = vmatprep.subr.bf16.mxu0 0
    %478 = vmatpush2.bf16.msra.mxu0 0
    %479 = vmatprep.subr.bf16.mxu0 0
    %480 = vmatpush2.bf16.msra.mxu0 0
    %481 = vmatprep.subr.bf16.mxu0 0
    %482 = vmatpush2.bf16.msra.mxu0 0
    %483 = vmatprep.subr.bf16.mxu0 0
    %484 = vmatpush2.bf16.msra.mxu0 0
    %485 = vmatprep.subr.bf16.mxu0 0
    %486 = vmatpush2.bf16.msra.mxu0 0
    %487 = vmatprep.subr.bf16.mxu0 0
    %488 = vmatpush2.bf16.msra.mxu0 0
    %489 = vmatprep.subr.bf16.mxu0 0
    %490 = vmatpush2.bf16.msra.mxu0 0
    %491 = vmatprep.mubr.bf16.mxu0 0
    %492 = vmatmul.mubr.bf16.gmra.mxu0 %v406
    %v493 = vpop.f32.mrf.mxu0
    %v494 = vadd.f32 0.0, %v493
    %v495 = vpop.f32.mrf.mxu0
    %v496 = vpop.f32.mrf.mxu0
    %v497 = vadd.f32 0.0, %v496
    %v498 = vpop.f32.mrf.mxu0
    %499 = vdwg.mxu0
    %500 = vst [vmem:[#allocation14] sm:$0xff] %v494
    %501 = vst [vmem:[#allocation14 + $0x8] sm:$0xff] %v497
    // Predicated region
    $region54: #{tpu_custom_call.1} parent=1 // pred_check
      _
    $region55: #{tpu_custom_call.1} parent=1 // pred_check_branch
      %503 = sbr.rel (0) target = $region57
    $region56: #{tpu_custom_call.1} parent=1 // pred_region
      %s505 = ssub.s32 256, 256
      %506 = vsyncadd [#allocation4], %s505
      %s507 = sshll.u32 [#allocation13], 4
      %s508 = int_to_ptr.vmem [resolvable:$true] %s507
      %513 = dma.vmem_to_hbm [thread:$0]  %s508, 256, %s7, [#allocation4], 128, 128, 8
    $region57: #{tpu_custom_call.1} parent=1 // pred_fallthru
      _
    // Predicated region
    $region58: #{tpu_custom_call.1} parent=1 // pred_check
      _
    $region59: #{tpu_custom_call.1} parent=1 // pred_check_branch
      %515 = sbr.rel (0) target = $region61
    $region60: #{tpu_custom_call.1} parent=1 // pred_region
      %s517 = ssub.s32 256, 256
      %518 = vsyncadd [#allocation15], %s517
      %s519 = sshll.u32 [#allocation14], 4
      %s520 = int_to_ptr.vmem [resolvable:$true] %s519
      %525 = dma.vmem_to_hbm [thread:$0]  %s520, 256, %s8, [#allocation15], 128, 128, 8
    $region61: #{tpu_custom_call.1} parent=1 // pred_fallthru
      _
    // Predicated region
    $region62: #{tpu_custom_call.1} parent=1 // pred_check
      _
    $region63: #{tpu_custom_call.1} parent=1 // pred_check_branch
      %527 = sbr.rel (0) target = $region65
    $region64: #{tpu_custom_call.1} parent=1 // pred_region
      %528 = dma.done [#allocation4], 256
    $region65: #{tpu_custom_call.1} parent=1 // pred_fallthru
      _
    // Predicated region
    $region66: #{tpu_custom_call.1} parent=1 // pred_check
      _
    $region67: #{tpu_custom_call.1} parent=1 // pred_check_branch
      %530 = sbr.rel (0) target = $region69
    $region68: #{tpu_custom_call.1} parent=1 // pred_region
      %531 = dma.done [#allocation15], 256
    $region69: #{tpu_custom_call.1} parent=1 // pred_fallthru
      _
    %532 = vsyncpa [#allocation3], 1
    %533 = vsyncpa [#allocation6], 1
    %534 = vsyncpa [#allocation9], 1
    %535 = vsyncpa [#allocation12], 1
    %536 = vsyncpa [#allocation4], 1
    %537 = vsyncpa [#allocation15], 1

</llo_original>
